<compile_context>
chip_gen: v7x
topology: tpu7x:2x2x1
jax: 0.10.0
libtpu: 0.0.40
codegen_flags: <defaults>
</compile_context>

<pallas_src>
import functools

import jax
import jax.numpy as jnp
from jax.experimental import pallas as pl
from jax.experimental.pallas import tpu as pltpu


def _round_up(n, m):
    return ((n + m - 1) // m) * m


def _bf16_elementwise_ok():
    """bf16 VALU exists on v6e/v7x; keep f32 elementwise on v5e and older."""
    try:
        kind = jax.devices()[0].device_kind.lower()
    except Exception:
        return False
    return not any(g in kind for g in ("v2", "v3", "v4", "v5"))


def _binary_classifier_kernel(x_ref, w1_ref, b1_ref, w2_ref, b2_ref,
                              w3_ref, b3_ref, o_ref):
    bf16 = jnp.bfloat16

    x = x_ref[...].astype(bf16)                                     # (tm, D)

    # layer1 + ReLU  (bf16 MXU operands, f32 accumulate; epilogue in b1.dtype)
    h1 = jnp.dot(x, w1_ref[...], preferred_element_type=jnp.float32)
    h1 = jnp.maximum(h1.astype(b1_ref.dtype) + b1_ref[...], 0.0)    # (tm, H)

    # layer2 + ReLU
    h2 = jnp.dot(h1.astype(bf16), w2_ref[...],
                 preferred_element_type=jnp.float32)
    h2 = jnp.maximum(h2.astype(b2_ref.dtype) + b2_ref[...], 0.0)    # (tm, H)

    # output head: (1, H) . (tm, H)^T -> (1, tm) lane-dense row of logits.
    # NT contraction lowers directly on the MXU (no XLU transpose of h2).
    logit = jax.lax.dot_general(
        w3_ref[...], h2.astype(bf16),
        dimension_numbers=(((1,), (1,)), ((), ())),
        preferred_element_type=jnp.float32) + b3_ref[...]           # (1, tm) f32

    # sigmoid: exp and approx-reciprocal both land on the EUP slot.
    o_ref[...] = pl.reciprocal(1.0 + jnp.exp(-logit),
                               approx=True).astype(o_ref.dtype)


@functools.partial(jax.jit, static_argnames=("block_rows",))
def _forward_impl(x, w1b, b1e, w2b, b2e, w3b, b3f, *, block_rows):
    B, D = x.shape
    H = w1b.shape[1]

    # Row tile: large when B is large; small B rounds to a 128 multiple so the
    # (1, tm) output block stays lane-dense and matmuls stay full-width.
    tm = min(block_rows, _round_up(B, 128))
    grid_rows = pl.cdiv(B, tm)           # partial/OOB last block; no jnp.pad of x
    Bp = grid_rows * tm                  # padded output slab (our own allocation)

    # Full-array blocks with constant index_map -> DMA'd once, VMEM-resident.
    resident = lambda a: pl.BlockSpec(a.shape, lambda i: tuple(0 for _ in a.shape))

    flops = 2 * B * (D * H + H * H + H)
    bytes_accessed = (x.size * x.dtype.itemsize + 4 * B
                      + w1b.size * 2 + w2b.size * 2 + w3b.size * 2
                      + b1e.size * b1e.dtype.itemsize
                      + b2e.size * b2e.dtype.itemsize + 4)

    out_row = pl.pallas_call(
        _binary_classifier_kernel,
        out_shape=jax.ShapeDtypeStruct((1, Bp), jnp.float32),
        grid=(grid_rows,),
        in_specs=[
            pl.BlockSpec((tm, D), lambda i: (i, 0)),   # x tiles stream + pipeline
            resident(w1b), resident(b1e),
            resident(w2b), resident(b2e),
            resident(w3b), resident(b3f),
        ],
        out_specs=pl.BlockSpec((1, tm), lambda i: (0, i)),  # lane-dense output slab
        compiler_params=pltpu.CompilerParams(
            dimension_semantics=("parallel",),          # megacore split on v7x
            vmem_limit_bytes=48 * 1024 * 1024,          # <=48 MiB: safe per-TC on v7x
        ),
        cost_estimate=pl.CostEstimate(
            flops=flops, transcendentals=2 * B, bytes_accessed=bytes_accessed),
    )(x, w1b, b1e, w2b, b2e, w3b, b3f)

    # Tail columns (>= B) of the slab are garbage from the OOB last block:
    # always slice here, never hand the raw slab downstream.
    return out_row[0, :B].reshape(B, 1)


def binary_classifier_forward(x, params, *, block_rows=8192):
    """x: (B, input_dim), f32 or bf16.

    params layout: w1 (in, hidden), w2 (hidden, hidden) [transposed vs PyTorch],
    w3 (1, hidden) [PyTorch layout], biases b1/b2 (1, hidden), b3 (1, 1), all f32.
    """
    assert block_rows % 128 == 0, "block_rows must be a multiple of 128"

    ew_dtype = jnp.bfloat16 if _bf16_elementwise_ok() else jnp.float32

    # One-time tiny casts (weights bf16 for the MXU, biases to epilogue dtype).
    w1b = params["w1"].astype(jnp.bfloat16)
    w2b = params["w2"].astype(jnp.bfloat16)
    w3b = params["w3"].astype(jnp.bfloat16)
    b1e = params["b1"].astype(ew_dtype)
    b2e = params["b2"].astype(ew_dtype)
    b3f = params["b3"].astype(jnp.float32)

    return _forward_impl(x, w1b, b1e, w2b, b2e, w3b, b3f, block_rows=block_rows)


def init_params(key, input_dim, hidden_dim):
    """Deterministic init mimicking nn.Linear's uniform(-1/sqrt(fan_in), ...)."""
    ks = jax.random.split(key, 6)

    def linear(kw, kb, fan_in, fan_out, in_by_out=True):
        bound = 1.0 / jnp.sqrt(float(fan_in))
        shape = (fan_in, fan_out) if in_by_out else (fan_out, fan_in)
        w = jax.random.uniform(kw, shape, jnp.float32, -bound, bound)
        b = jax.random.uniform(kb, (1, fan_out), jnp.float32, -bound, bound)
        return w, b

    w1, b1 = linear(ks[0], ks[1], input_dim, hidden_dim)
    w2, b2 = linear(ks[2], ks[3], hidden_dim, hidden_dim)
    w3, b3 = linear(ks[4], ks[5], hidden_dim, 1, in_by_out=False)  # (1, hidden), (1, 1)
    return {"w1": w1, "b1": b1, "w2": w2, "b2": b2, "w3": w3, "b3": b3}


def reference_forward(x, p):
    h1 = jnp.maximum(x @ p["w1"] + p["b1"], 0.0)
    h2 = jnp.maximum(h1 @ p["w2"] + p["b2"], 0.0)
    logit = h2 @ p["w3"].T + p["b3"]
    return jax.nn.sigmoid(logit)


if __name__ == "__main__":
    key = jax.random.PRNGKey(0)
    k_x1, k_x2, k_p = jax.random.split(key, 3)

    input_dim, hidden_dim = 32, 32
    params = init_params(k_p, input_dim, hidden_dim)

    # Case 1: B < 128 (tile rounds up to 128, single partial block).
    # Case 2: B = 300 with block_rows=128 -> grid of 3 with a partial last block
    #         (exercises the no-pad OOB tail path).
    for k_x, batch, block_rows in [(k_x1, 8, 8192), (k_x2, 300, 128)]:
        x = jax.random.normal(k_x, (batch, input_dim), jnp.float32)

        out = jax.block_until_ready(
            binary_classifier_forward(x, params, block_rows=block_rows))
        ref = reference_forward(x, params)

        assert out.shape == (batch, 1), out.shape
        err = float(jnp.max(jnp.abs(out - ref)))
        # bf16 MXU operands (+ optional bf16 epilogue, approx reciprocal):
        # expect ~1e-2 abs error after sigmoid.
        assert err < 3e-2, f"max err {err}"

    print("KERNEL_OK")
</pallas_src>

<mosaic_0001>
module attributes {stable_mosaic.version = 11 : i64} {
  func.func @_binary_classifier_kernel(%arg0: i32, %arg1: memref<128x32xf32, #tpu.memory_space<vmem>>, %arg2: memref<32x32xbf16, #tpu.memory_space<vmem>>, %arg3: memref<1x32xbf16, #tpu.memory_space<vmem>>, %arg4: memref<32x32xbf16, #tpu.memory_space<vmem>>, %arg5: memref<1x32xbf16, #tpu.memory_space<vmem>>, %arg6: memref<1x32xbf16, #tpu.memory_space<vmem>>, %arg7: memref<1x1xf32, #tpu.memory_space<vmem>>, %arg8: memref<1x128xf32, #tpu.memory_space<vmem>>) attributes {dimension_semantics = [#tpu.dimension_semantics<parallel>], iteration_bounds = array<i64: 1>, scalar_prefetch = 0 : i64, scratch_operands = 0 : i64, tpu.core_type = #tpu.core_type<tc>, window_params = [{transform_indices = @transform_0, window_bounds = array<i64: 128, 32>}, {pipeline_mode = #tpu.pipeline_mode<synchronous>, transform_indices = @transform_1, window_bounds = array<i64: 32, 32>}, {pipeline_mode = #tpu.pipeline_mode<synchronous>, transform_indices = @transform_2, window_bounds = array<i64: 1, 32>}, {pipeline_mode = #tpu.pipeline_mode<synchronous>, transform_indices = @transform_3, window_bounds = array<i64: 32, 32>}, {pipeline_mode = #tpu.pipeline_mode<synchronous>, transform_indices = @transform_4, window_bounds = array<i64: 1, 32>}, {pipeline_mode = #tpu.pipeline_mode<synchronous>, transform_indices = @transform_5, window_bounds = array<i64: 1, 32>}, {pipeline_mode = #tpu.pipeline_mode<synchronous>, transform_indices = @transform_6, window_bounds = array<i64: 1, 1>}, {transform_indices = @transform_7, window_bounds = array<i64: 1, 128>}]} {
    %c0 = arith.constant 0 : index
    %c0_0 = arith.constant 0 : index
    %0 = vector.load %arg1[%c0, %c0_0] : memref<128x32xf32, #tpu.memory_space<vmem>>, vector<128x32xf32>
    %1 = arith.truncf %0 : vector<128x32xf32> to vector<128x32xbf16>
    %c0_1 = arith.constant 0 : index
    %c0_2 = arith.constant 0 : index
    %2 = vector.load %arg2[%c0_1, %c0_2] : memref<32x32xbf16, #tpu.memory_space<vmem>>, vector<32x32xbf16>
    %cst = arith.constant dense<0.000000e+00> : vector<128x32xf32>
    %3 = tpu.matmul %1, %2, %cst {dimension_numbers = #tpu.dot_dimension_numbers<[1], [0], [0], [1], [0, 0, 1, 1], [], []>} : vector<128x32xbf16>, vector<32x32xbf16>, vector<128x32xf32> -> vector<128x32xf32>
    %4 = arith.truncf %3 : vector<128x32xf32> to vector<128x32xbf16>
    %c0_3 = arith.constant 0 : index
    %c0_4 = arith.constant 0 : index
    %5 = vector.load %arg3[%c0_3, %c0_4] : memref<1x32xbf16, #tpu.memory_space<vmem>>, vector<1x32xbf16>
    %6 = vector.broadcast %5 : vector<1x32xbf16> to vector<128x32xbf16>
    %7 = arith.addf %4, %6 : vector<128x32xbf16>
    %cst_5 = arith.constant 0.000000e+00 : bf16
    %8 = vector.broadcast %cst_5 : bf16 to vector<128x32xbf16>
    %9 = arith.maximumf %7, %8 : vector<128x32xbf16>
    %c0_6 = arith.constant 0 : index
    %c0_7 = arith.constant 0 : index
    %10 = vector.load %arg4[%c0_6, %c0_7] : memref<32x32xbf16, #tpu.memory_space<vmem>>, vector<32x32xbf16>
    %cst_8 = arith.constant dense<0.000000e+00> : vector<128x32xf32>
    %11 = tpu.matmul %9, %10, %cst_8 {dimension_numbers = #tpu.dot_dimension_numbers<[1], [0], [0], [1], [0, 0, 1, 1], [], []>} : vector<128x32xbf16>, vector<32x32xbf16>, vector<128x32xf32> -> vector<128x32xf32>
    %12 = arith.truncf %11 : vector<128x32xf32> to vector<128x32xbf16>
    %c0_9 = arith.constant 0 : index
    %c0_10 = arith.constant 0 : index
    %13 = vector.load %arg5[%c0_9, %c0_10] : memref<1x32xbf16, #tpu.memory_space<vmem>>, vector<1x32xbf16>
    %14 = vector.broadcast %13 : vector<1x32xbf16> to vector<128x32xbf16>
    %15 = arith.addf %12, %14 : vector<128x32xbf16>
    %cst_11 = arith.constant 0.000000e+00 : bf16
    %16 = vector.broadcast %cst_11 : bf16 to vector<128x32xbf16>
    %17 = arith.maximumf %15, %16 : vector<128x32xbf16>
    %c0_12 = arith.constant 0 : index
    %c0_13 = arith.constant 0 : index
    %18 = vector.load %arg6[%c0_12, %c0_13] : memref<1x32xbf16, #tpu.memory_space<vmem>>, vector<1x32xbf16>
    %cst_14 = arith.constant dense<0.000000e+00> : vector<1x128xf32>
    %19 = tpu.matmul %18, %17, %cst_14 {dimension_numbers = #tpu.dot_dimension_numbers<[1], [1], [0], [0], [0, 0, 1, 0], [], []>} : vector<1x32xbf16>, vector<128x32xbf16>, vector<1x128xf32> -> vector<1x128xf32>
    %c0_15 = arith.constant 0 : index
    %c0_16 = arith.constant 0 : index
    %20 = vector.load %arg7[%c0_15, %c0_16] : memref<1x1xf32, #tpu.memory_space<vmem>>, vector<1x1xf32>
    %21 = vector.broadcast %20 : vector<1x1xf32> to vector<1x128xf32>
    %22 = arith.addf %19, %21 : vector<1x128xf32>
    %cst_17 = arith.constant 0.000000e+00 : f32
    %23 = vector.broadcast %cst_17 : f32 to vector<1x128xf32>
    %24 = arith.subf %23, %22 : vector<1x128xf32>
    %25 = math.exp %24 : vector<1x128xf32>
    %cst_18 = arith.constant 1.000000e+00 : f32
    %26 = vector.broadcast %cst_18 : f32 to vector<1x128xf32>
    %27 = arith.addf %26, %25 : vector<1x128xf32>
    %28 = tpu.reciprocal %27 {approx = true} : vector<1x128xf32> -> vector<1x128xf32>
    %c0_19 = arith.constant 0 : index
    %c0_20 = arith.constant 0 : index
    %29 = vector.load %arg8[%c0_19, %c0_20] : memref<1x128xf32, #tpu.memory_space<vmem>>, vector<1x128xf32>
    tpu.vector_store %arg8[%c0_19, %c0_20], %28 {strides = array<i32>} : memref<1x128xf32, #tpu.memory_space<vmem>>, vector<1x128xf32>,
    return
  }
  func.func @transform_0(%arg0: i32) -> (i32, i32) {
    %c0_i32 = arith.constant 0 : i32
    %c0_i32_0 = arith.constant 0 : i32
    return %arg0, %c0_i32 : i32, i32
  }
  func.func @transform_1(%arg0: i32) -> (i32, i32) {
    %c0_i32 = arith.constant 0 : i32
    %c0_i32_0 = arith.constant 0 : i32
    %c0_i32_1 = arith.constant 0 : i32
    return %c0_i32, %c0_i32_0 : i32, i32
  }
  func.func @transform_2(%arg0: i32) -> (i32, i32) {
    %c0_i32 = arith.constant 0 : i32
    %c0_i32_0 = arith.constant 0 : i32
    %c0_i32_1 = arith.constant 0 : i32
    return %c0_i32, %c0_i32_0 : i32, i32
  }
  func.func @transform_3(%arg0: i32) -> (i32, i32) {
    %c0_i32 = arith.constant 0 : i32
    %c0_i32_0 = arith.constant 0 : i32
    %c0_i32_1 = arith.constant 0 : i32
    return %c0_i32, %c0_i32_0 : i32, i32
  }
  func.func @transform_4(%arg0: i32) -> (i32, i32) {
    %c0_i32 = arith.constant 0 : i32
    %c0_i32_0 = arith.constant 0 : i32
    %c0_i32_1 = arith.constant 0 : i32
    return %c0_i32, %c0_i32_0 : i32, i32
  }
  func.func @transform_5(%arg0: i32) -> (i32, i32) {
    %c0_i32 = arith.constant 0 : i32
    %c0_i32_0 = arith.constant 0 : i32
    %c0_i32_1 = arith.constant 0 : i32
    return %c0_i32, %c0_i32_0 : i32, i32
  }
  func.func @transform_6(%arg0: i32) -> (i32, i32) {
    %c0_i32 = arith.constant 0 : i32
    %c0_i32_0 = arith.constant 0 : i32
    %c0_i32_1 = arith.constant 0 : i32
    return %c0_i32, %c0_i32_0 : i32, i32
  }
  func.func @transform_7(%arg0: i32) -> (i32, i32) {
    %c0_i32 = arith.constant 0 : i32
    %c0_i32_0 = arith.constant 0 : i32
    return %c0_i32, %arg0 : i32, i32
  }
}

</mosaic_0001>

<llo_original>
// kernel: _forward_impl.1
$region0: #{_forward_impl.1}
  #allocation0 [shape = 'u32[]', space=smem, size = 0x4, offset = 0x4, fixed_abs, tag = 'smem constant byte address 0x4 - core index']
  #allocation1 [shape = 'u32[144,128]{1,0:T(1,128)}', space=vmem, size = 0x12000, scoped, tag = 'internal scratch']
  #allocation2 [shape = 'f32[1,1]{1,0:T(1,128)S(1)}', space=vmem, size = 0x200, scoped, tag = 'scoped memory for _forward_impl.1']
  %s0 = inlined_call_operand.hbm [shape: f32[8,32], index: 0, kind: input, shape index: {}]
  %s1 = inlined_call_operand.hbm [shape: bf16[32,32], index: 1, kind: input, shape index: {}]
  %s2 = inlined_call_operand.vmem [shape: bf16[1,32], index: 2, kind: input, shape index: {}]
  %s3 = inlined_call_operand.hbm [shape: bf16[32,32], index: 3, kind: input, shape index: {}]
  %s4 = inlined_call_operand.vmem [shape: bf16[1,32], index: 4, kind: input, shape index: {}]
  %s5 = inlined_call_operand.vmem [shape: bf16[1,32], index: 5, kind: input, shape index: {}]
  %s6 = inlined_call_operand.<no memory space> [shape: f32[1,1], index: 6, kind: input, shape index: {}]
  %s7 = inlined_call_operand.vmem [shape: f32[1,128], index: 7, kind: output, shape index: {}]
  %s8 = sld [smem:[#allocation0]]
  $region50: #{_forward_impl.1} parent=0
    _
  %s10 = ssub.s32 1, %s8
  %s11 = scalar_select 0, %s10, %s8
  %v12 = vstv %s6
  %13 = vst [vmem:[#allocation2] sm:$0x1] %v12
  $region1: #{_forward_impl.1} parent=0
    #allocation3 [shape = 'u8[65536]{0}', space=vmem, size = 0x10000, scoped, tag = 'input window, operand 0, single buffered']
    #allocation4 [shape = 's32[1]{0}', space=sflag, size = 0x4, scoped, tag = 'scoped memory for _forward_impl.1']
    #allocation5 [shape = 'u8[8192]{0}', space=vmem, size = 0x2000, scoped, tag = 'input window, operand 1, single buffered']
    #allocation6 [shape = 's32[1]{0}', space=sflag, size = 0x4, scoped, tag = 'scoped memory for _forward_impl.1']
    #allocation7 [shape = 'u8[8192]{0}', space=vmem, size = 0x2000, scoped, tag = 'input window, operand 3, single buffered']
    %14 = vsyncpa [#allocation4], 0
    %15 = vsyncpa [#allocation6], 0
    // Predicated region
    $region2: #{_forward_impl.1} parent=1 // pred_check
      _
    $region3: #{_forward_impl.1} parent=1 // pred_check_branch
      %17 = sbr.rel (0) target = $region5
    $region4: #{_forward_impl.1} parent=1 // pred_region
      %s19 = ssub.s32 2048, 128
      %20 = vsyncadd [#allocation4], %s19
      %s21 = sshll.u32 [#allocation3], 4
      %s22 = int_to_ptr.vmem [resolvable:$true] %s21
      %27 = dma.hbm_to_vmem [thread:$0]  %s0, 128, %s22, [#allocation4], 128, 128, 8
    $region5: #{_forward_impl.1} parent=1 // pred_fallthru
      _
    // Predicated region
    $region6: #{_forward_impl.1} parent=1 // pred_check
      _
    $region7: #{_forward_impl.1} parent=1 // pred_check_branch
      %29 = sbr.rel (0) target = $region9
    $region8: #{_forward_impl.1} parent=1 // pred_region
      %s31 = ssub.s32 256, 256
      %32 = vsyncadd [#allocation6], %s31
      %s33 = sshll.u32 [#allocation5], 4
      %s34 = int_to_ptr.vmem [resolvable:$true] %s33
      %39 = dma.hbm_to_vmem [thread:$0]  %s1, 256, %s34, [#allocation6], 64, 64, 4
    $region9: #{_forward_impl.1} parent=1 // pred_fallthru
      _
    // Predicated region
    $region10: #{_forward_impl.1} parent=1 // pred_check
      _
    $region11: #{_forward_impl.1} parent=1 // pred_check_branch
      %41 = sbr.rel (0) target = $region13
    $region12: #{_forward_impl.1} parent=1 // pred_region
      _
    $region13: #{_forward_impl.1} parent=1 // pred_fallthru
      _
    // Predicated region
    $region14: #{_forward_impl.1} parent=1 // pred_check
      _
    $region15: #{_forward_impl.1} parent=1 // pred_check_branch
      %43 = sbr.rel (0) target = $region17
    $region16: #{_forward_impl.1} parent=1 // pred_region
      %s45 = ssub.s32 256, 256
      %46 = vsyncadd [#allocation6], %s45
      %s47 = sshll.u32 [#allocation7], 4
      %s48 = int_to_ptr.vmem [resolvable:$true] %s47
      %53 = dma.hbm_to_vmem [thread:$0]  %s3, 256, %s48, [#allocation6], 64, 64, 4
    $region17: #{_forward_impl.1} parent=1 // pred_fallthru
      _
    // Predicated region
    $region18: #{_forward_impl.1} parent=1 // pred_check
      _
    $region19: #{_forward_impl.1} parent=1 // pred_check_branch
      %55 = sbr.rel (0) target = $region21
    $region20: #{_forward_impl.1} parent=1 // pred_region
      _
    $region21: #{_forward_impl.1} parent=1 // pred_fallthru
      _
    // Predicated region
    $region22: #{_forward_impl.1} parent=1 // pred_check
      _
    $region23: #{_forward_impl.1} parent=1 // pred_check_branch
      %57 = sbr.rel (0) target = $region25
    $region24: #{_forward_impl.1} parent=1 // pred_region
      _
    $region25: #{_forward_impl.1} parent=1 // pred_fallthru
      _
    // Predicated region
    $region26: #{_forward_impl.1} parent=1 // pred_check
      _
    $region27: #{_forward_impl.1} parent=1 // pred_check_branch
      %59 = sbr.rel (0) target = $region29
    $region28: #{_forward_impl.1} parent=1 // pred_region
      _
    $region29: #{_forward_impl.1} parent=1 // pred_fallthru
      _
    // Predicated region
    $region30: #{_forward_impl.1} parent=1 // pred_check
      _
    $region31: #{_forward_impl.1} parent=1 // pred_check_branch
      %61 = sbr.rel (0) target = $region33
    $region32: #{_forward_impl.1} parent=1 // pred_region
      %62 = dma.done [#allocation4], 2048
    $region33: #{_forward_impl.1} parent=1 // pred_fallthru
      _
    // Predicated region
    $region34: #{_forward_impl.1} parent=1 // pred_check
      _
    $region35: #{_forward_impl.1} parent=1 // pred_check_branch
      %64 = sbr.rel (0) target = $region37
    $region36: #{_forward_impl.1} parent=1 // pred_region
      %65 = dma.done [#allocation6], 256
    $region37: #{_forward_impl.1} parent=1 // pred_fallthru
      _
    // Predicated region
    $region38: #{_forward_impl.1} parent=1 // pred_check
      _
    $region39: #{_forward_impl.1} parent=1 // pred_check_branch
      %67 = sbr.rel (0) target = $region41
    $region40: #{_forward_impl.1} parent=1 // pred_region
      %68 = dma.done [#allocation6], 256
    $region41: #{_forward_impl.1} parent=1 // pred_fallthru
      _
    %v70 = vld [vmem:[#allocation3] sm:$0xff]
    %v71 = vld [vmem:[#allocation3 + $0x8] sm:$0xff]
    %v72 = vld [vmem:[#allocation3 + $0x10] sm:$0xff]
    %v73 = vld [vmem:[#allocation3 + $0x18] sm:$0xff]
    %v74 = vld [vmem:[#allocation3 + $0x20] sm:$0xff]
    %v75 = vld [vmem:[#allocation3 + $0x28] sm:$0xff]
    %v76 = vld [vmem:[#allocation3 + $0x30] sm:$0xff]
    %v77 = vld [vmem:[#allocation3 + $0x38] sm:$0xff]
    %v78 = vld [vmem:[#allocation3 + $0x40] sm:$0xff]
    %v79 = vld [vmem:[#allocation3 + $0x48] sm:$0xff]
    %v80 = vld [vmem:[#allocation3 + $0x50] sm:$0xff]
    %v81 = vld [vmem:[#allocation3 + $0x58] sm:$0xff]
    %v82 = vld [vmem:[#allocation3 + $0x60] sm:$0xff]
    %v83 = vld [vmem:[#allocation3 + $0x68] sm:$0xff]
    %v84 = vld [vmem:[#allocation3 + $0x70] sm:$0xff]
    %v85 = vld [vmem:[#allocation3 + $0x78] sm:$0xff]
    %v86 = vpack.c.bf16 %v71, %v70
    %v87 = vpack.c.bf16 %v73, %v72
    %v88 = vpack.c.bf16 %v75, %v74
    %v89 = vpack.c.bf16 %v77, %v76
    %v90 = vpack.c.bf16 %v79, %v78
    %v91 = vpack.c.bf16 %v81, %v80
    %v92 = vpack.c.bf16 %v83, %v82
    %v93 = vpack.c.bf16 %v85, %v84
    %v94 = vld [vmem:[#allocation5] sm:$0xf]
    %v95 = vld [vmem:[#allocation5 + $0x4] sm:$0xf]
    %v96 = vld [vmem:[#allocation5 + $0x8] sm:$0xf]
    %v97 = vld [vmem:[#allocation5 + $0xc] sm:$0xf]
    %v102 = vunpack.c.l.b16 %v94
    %v103 = vunpack.c.l.b16 %v95
    %v104 = vunpack.c.l.b16 %v96
    %v105 = vunpack.c.l.b16 %v97
    %v106 = vpack.c.b16 %v103, %v102
    %v107 = vpack.c.b16 %v105, %v104
    %vm110 = vcmask 261120
    %v112 = vsel %vm110, %v86, 0
    %v115 = vsel %vm110, %v87, 0
    %v118 = vsel %vm110, %v88, 0
    %v121 = vsel %vm110, %v89, 0
    %v124 = vsel %vm110, %v90, 0
    %v127 = vsel %vm110, %v91, 0
    %v130 = vsel %vm110, %v92, 0
    %v133 = vsel %vm110, %v93, 0
    %135 = vmatprep.subr.bf16.mxu0 0
    %136 = vmatpush1.bf16.msra.mxu0 %v106
    %137 = vmatprep.subr.bf16.mxu0 0
    %138 = vmatpush1.bf16.msra.mxu0 %v107
    %139 = vmatprep.subr.bf16.mxu0 0
    %140 = vmatpush1.bf16.msra.mxu0 0
    %141 = vmatprep.subr.bf16.mxu0 0
    %142 = vmatpush1.bf16.msra.mxu0 0
    %143 = vmatprep.subr.bf16.mxu0 0
    %144 = vmatpush1.bf16.msra.mxu0 0
    %145 = vmatprep.subr.bf16.mxu0 0
    %146 = vmatpush1.bf16.msra.mxu0 0
    %147 = vmatprep.subr.bf16.mxu0 0
    %148 = vmatpush1.bf16.msra.mxu0 0
    %149 = vmatprep.subr.bf16.mxu0 0
    %150 = vmatpush1.bf16.msra.mxu0 0
    %151 = vmatprep.subr.bf16.mxu0 0
    %152 = vmatpush1.bf16.msra.mxu0 0
    %153 = vmatprep.subr.bf16.mxu0 0
    %154 = vmatpush1.bf16.msra.mxu0 0
    %155 = vmatprep.subr.bf16.mxu0 0
    %156 = vmatpush1.bf16.msra.mxu0 0
    %157 = vmatprep.subr.bf16.mxu0 0
    %158 = vmatpush1.bf16.msra.mxu0 0
    %159 = vmatprep.subr.bf16.mxu0 0
    %160 = vmatpush1.bf16.msra.mxu0 0
    %161 = vmatprep.subr.bf16.mxu0 0
    %162 = vmatpush1.bf16.msra.mxu0 0
    %163 = vmatprep.subr.bf16.mxu0 0
    %164 = vmatpush1.bf16.msra.mxu0 0
    %165 = vmatprep.subr.bf16.mxu0 0
    %166 = vmatpush1.bf16.msra.mxu0 0
    %167 = vmatprep.mubr.bf16.mxu0 0
    %168 = vmatmul.mubr.bf16.gmra.mrb[0].mxu0 %v112
    %v169 = vpop.f32.mrb[0].mxu0
    %v170 = vadd.f32 0.0, %v169
    %v171 = vpop.f32.mrb[0].mxu0
    %v172 = vpop.f32.mrb[0].mxu0
    %v173 = vadd.f32 0.0, %v172
    %v174 = vpop.f32.mrb[0].mxu0
    %175 = vmatprep.mubr.bf16.mxu0 0
    %176 = vmatmul.mubr.bf16.gmra.mrb[0].mxu0 %v115
    %v177 = vpop.f32.mrb[0].mxu0
    %v178 = vadd.f32 0.0, %v177
    %v179 = vpop.f32.mrb[0].mxu0
    %v180 = vpop.f32.mrb[0].mxu0
    %v181 = vadd.f32 0.0, %v180
    %v182 = vpop.f32.mrb[0].mxu0
    %183 = vmatprep.mubr.bf16.mxu0 0
    %184 = vmatmul.mubr.bf16.gmra.mrb[0].mxu0 %v118
    %v185 = vpop.f32.mrb[0].mxu0
    %v186 = vadd.f32 0.0, %v185
    %v187 = vpop.f32.mrb[0].mxu0
    %v188 = vpop.f32.mrb[0].mxu0
    %v189 = vadd.f32 0.0, %v188
    %v190 = vpop.f32.mrb[0].mxu0
    %191 = vmatprep.mubr.bf16.mxu0 0
    %192 = vmatmul.mubr.bf16.gmra.mrb[0].mxu0 %v121
    %v193 = vpop.f32.mrb[0].mxu0
    %v194 = vadd.f32 0.0, %v193
    %v195 = vpop.f32.mrb[0].mxu0
    %v196 = vpop.f32.mrb[0].mxu0
    %v197 = vadd.f32 0.0, %v196
    %v198 = vpop.f32.mrb[0].mxu0
    %199 = vmatprep.mubr.bf16.mxu0 0
    %200 = vmatmul.mubr.bf16.gmra.mrb[0].mxu0 %v124
    %v201 = vpop.f32.mrb[0].mxu0
    %v202 = vadd.f32 0.0, %v201
    %v203 = vpop.f32.mrb[0].mxu0
    %v204 = vpop.f32.mrb[0].mxu0
    %v205 = vadd.f32 0.0, %v204
    %v206 = vpop.f32.mrb[0].mxu0
    %207 = vmatprep.mubr.bf16.mxu0 0
    %208 = vmatmul.mubr.bf16.gmra.mrb[0].mxu0 %v127
    %v209 = vpop.f32.mrb[0].mxu0
    %v210 = vadd.f32 0.0, %v209
    %v211 = vpop.f32.mrb[0].mxu0
    %v212 = vpop.f32.mrb[0].mxu0
    %v213 = vadd.f32 0.0, %v212
    %v214 = vpop.f32.mrb[0].mxu0
    %215 = vmatprep.mubr.bf16.mxu0 0
    %216 = vmatmul.mubr.bf16.gmra.mrb[0].mxu0 %v130
    %v217 = vpop.f32.mrb[0].mxu0
    %v218 = vadd.f32 0.0, %v217
    %v219 = vpop.f32.mrb[0].mxu0
    %v220 = vpop.f32.mrb[0].mxu0
    %v221 = vadd.f32 0.0, %v220
    %v222 = vpop.f32.mrb[0].mxu0
    %223 = vmatprep.mubr.bf16.mxu0 0
    %224 = vmatmul.mubr.bf16.gmra.mrb[0].mxu0 %v133
    %v225 = vpop.f32.mrb[0].mxu0
    %v226 = vadd.f32 0.0, %v225
    %v227 = vpop.f32.mrb[0].mxu0
    %v228 = vpop.f32.mrb[0].mxu0
    %v229 = vadd.f32 0.0, %v228
    %v230 = vpop.f32.mrb[0].mxu0
    %231 = vdwg.mxu0
    %v232 = vpack.c.bf16 %v173, %v170
    %v233 = vpack.c.bf16 %v181, %v178
    %v234 = vpack.c.bf16 %v189, %v186
    %v235 = vpack.c.bf16 %v197, %v194
    %v236 = vpack.c.bf16 %v205, %v202
    %v237 = vpack.c.bf16 %v213, %v210
    %v238 = vpack.c.bf16 %v221, %v218
    %v239 = vpack.c.bf16 %v229, %v226
    %v240 = vld [vmem:[%s2] sm:$0x1]
    %v242 = vpack.i.b16 %v240, %v240
    %v244 = vlaneseq
    %v245 = vshrl.u32 %v244, 7
    %v246 = vsub.s32 0, %v245
    %v247 = vrot.slane %v242, %v246
    %v248 = vadd.bf16 %v232, %v247
    %v249 = vadd.bf16 %v233, %v247
    %v250 = vadd.bf16 %v234, %v247
    %v251 = vadd.bf16 %v235, %v247
    %v252 = vadd.bf16 %v236, %v247
    %v253 = vadd.bf16 %v237, %v247
    %v254 = vadd.bf16 %v238, %v247
    %v255 = vadd.bf16 %v239, %v247
    %v256 = vmax.bf16 %v248, 0
    %v257 = vmax.bf16 %v249, 0
    %v258 = vmax.bf16 %v250, 0
    %v259 = vmax.bf16 %v251, 0
    %v260 = vmax.bf16 %v252, 0
    %v261 = vmax.bf16 %v253, 0
    %v262 = vmax.bf16 %v254, 0
    %v263 = vmax.bf16 %v255, 0
    %v264 = vld [vmem:[#allocation7] sm:$0xf]
    %v265 = vld [vmem:[#allocation7 + $0x4] sm:$0xf]
    %v266 = vld [vmem:[#allocation7 + $0x8] sm:$0xf]
    %v267 = vld [vmem:[#allocation7 + $0xc] sm:$0xf]
    %v272 = vunpack.c.l.b16 %v264
    %v273 = vunpack.c.l.b16 %v265
    %v274 = vunpack.c.l.b16 %v266
    %v275 = vunpack.c.l.b16 %v267
    %v276 = vpack.c.b16 %v273, %v272
    %v277 = vpack.c.b16 %v275, %v274
    %v281 = vsel %vm110, %v256, 0
    %v284 = vsel %vm110, %v257, 0
    %v287 = vsel %vm110, %v258, 0
    %v290 = vsel %vm110, %v259, 0
    %v293 = vsel %vm110, %v260, 0
    %v296 = vsel %vm110, %v261, 0
    %v299 = vsel %vm110, %v262, 0
    %v302 = vsel %vm110, %v263, 0
    %304 = vmatprep.subr.bf16.mxu0 0
    %305 = vmatpush1.bf16.msra.mxu0 %v276
    %306 = vmatprep.subr.bf16.mxu0 0
    %307 = vmatpush1.bf16.msra.mxu0 %v277
    %308 = vmatprep.subr.bf16.mxu0 0
    %309 = vmatpush1.bf16.msra.mxu0 0
    %310 = vmatprep.subr.bf16.mxu0 0
    %311 = vmatpush1.bf16.msra.mxu0 0
    %312 = vmatprep.subr.bf16.mxu0 0
    %313 = vmatpush1.bf16.msra.mxu0 0
    %314 = vmatprep.subr.bf16.mxu0 0
    %315 = vmatpush1.bf16.msra.mxu0 0
    %316 = vmatprep.subr.bf16.mxu0 0
    %317 = vmatpush1.bf16.msra.mxu0 0
    %318 = vmatprep.subr.bf16.mxu0 0
    %319 = vmatpush1.bf16.msra.mxu0 0
    %320 = vmatprep.subr.bf16.mxu0 0
    %321 = vmatpush1.bf16.msra.mxu0 0
    %322 = vmatprep.subr.bf16.mxu0 0
    %323 = vmatpush1.bf16.msra.mxu0 0
    %324 = vmatprep.subr.bf16.mxu0 0
    %325 = vmatpush1.bf16.msra.mxu0 0
    %326 = vmatprep.subr.bf16.mxu0 0
    %327 = vmatpush1.bf16.msra.mxu0 0
    %328 = vmatprep.subr.bf16.mxu0 0
    %329 = vmatpush1.bf16.msra.mxu0 0
    %330 = vmatprep.subr.bf16.mxu0 0
    %331 = vmatpush1.bf16.msra.mxu0 0
    %332 = vmatprep.subr.bf16.mxu0 0
    %333 = vmatpush1.bf16.msra.mxu0 0
    %334 = vmatprep.subr.bf16.mxu0 0
    %335 = vmatpush1.bf16.msra.mxu0 0
    %336 = vmatprep.mubr.bf16.mxu0 0
    %337 = vmatmul.mubr.bf16.gmra.mrb[0].mxu0 %v281
    %v338 = vpop.f32.mrb[0].mxu0
    %v339 = vadd.f32 0.0, %v338
    %v340 = vpop.f32.mrb[0].mxu0
    %v341 = vpop.f32.mrb[0].mxu0
    %v342 = vadd.f32 0.0, %v341
    %v343 = vpop.f32.mrb[0].mxu0
    %344 = vmatprep.mubr.bf16.mxu0 0
    %345 = vmatmul.mubr.bf16.gmra.mrb[0].mxu0 %v284
    %v346 = vpop.f32.mrb[0].mxu0
    %v347 = vadd.f32 0.0, %v346
    %v348 = vpop.f32.mrb[0].mxu0
    %v349 = vpop.f32.mrb[0].mxu0
    %v350 = vadd.f32 0.0, %v349
    %v351 = vpop.f32.mrb[0].mxu0
    %352 = vmatprep.mubr.bf16.mxu0 0
    %353 = vmatmul.mubr.bf16.gmra.mrb[0].mxu0 %v287
    %v354 = vpop.f32.mrb[0].mxu0
    %v355 = vadd.f32 0.0, %v354
    %v356 = vpop.f32.mrb[0].mxu0
    %v357 = vpop.f32.mrb[0].mxu0
    %v358 = vadd.f32 0.0, %v357
    %v359 = vpop.f32.mrb[0].mxu0
    %360 = vmatprep.mubr.bf16.mxu0 0
    %361 = vmatmul.mubr.bf16.gmra.mrb[0].mxu0 %v290
    %v362 = vpop.f32.mrb[0].mxu0
    %v363 = vadd.f32 0.0, %v362
    %v364 = vpop.f32.mrb[0].mxu0
    %v365 = vpop.f32.mrb[0].mxu0
    %v366 = vadd.f32 0.0, %v365
    %v367 = vpop.f32.mrb[0].mxu0
    %368 = vmatprep.mubr.bf16.mxu0 0
    %369 = vmatmul.mubr.bf16.gmra.mrb[0].mxu0 %v293
    %v370 = vpop.f32.mrb[0].mxu0
    %v371 = vadd.f32 0.0, %v370
    %v372 = vpop.f32.mrb[0].mxu0
    %v373 = vpop.f32.mrb[0].mxu0
    %v374 = vadd.f32 0.0, %v373
    %v375 = vpop.f32.mrb[0].mxu0
    %376 = vmatprep.mubr.bf16.mxu0 0
    %377 = vmatmul.mubr.bf16.gmra.mrb[0].mxu0 %v296
    %v378 = vpop.f32.mrb[0].mxu0
    %v379 = vadd.f32 0.0, %v378
    %v380 = vpop.f32.mrb[0].mxu0
    %v381 = vpop.f32.mrb[0].mxu0
    %v382 = vadd.f32 0.0, %v381
    %v383 = vpop.f32.mrb[0].mxu0
    %384 = vmatprep.mubr.bf16.mxu0 0
    %385 = vmatmul.mubr.bf16.gmra.mrb[0].mxu0 %v299
    %v386 = vpop.f32.mrb[0].mxu0
    %v387 = vadd.f32 0.0, %v386
    %v388 = vpop.f32.mrb[0].mxu0
    %v389 = vpop.f32.mrb[0].mxu0
    %v390 = vadd.f32 0.0, %v389
    %v391 = vpop.f32.mrb[0].mxu0
    %392 = vmatprep.mubr.bf16.mxu0 0
    %393 = vmatmul.mubr.bf16.gmra.mrb[0].mxu0 %v302
    %v394 = vpop.f32.mrb[0].mxu0
    %v395 = vadd.f32 0.0, %v394
    %v396 = vpop.f32.mrb[0].mxu0
    %v397 = vpop.f32.mrb[0].mxu0
    %v398 = vadd.f32 0.0, %v397
    %v399 = vpop.f32.mrb[0].mxu0
    %400 = vdwg.mxu0
    %v401 = vpack.c.bf16 %v342, %v339
    %v402 = vpack.c.bf16 %v350, %v347
    %v403 = vpack.c.bf16 %v358, %v355
    %v404 = vpack.c.bf16 %v366, %v363
    %v405 = vpack.c.bf16 %v374, %v371
    %v406 = vpack.c.bf16 %v382, %v379
    %v407 = vpack.c.bf16 %v390, %v387
    %v408 = vpack.c.bf16 %v398, %v395
    %v409 = vld [vmem:[%s4] sm:$0x1]
    %v411 = vpack.i.b16 %v409, %v409
    %v413 = vlaneseq
    %v414 = vshrl.u32 %v413, 7
    %v415 = vsub.s32 0, %v414
    %v416 = vrot.slane %v411, %v415
    %v417 = vadd.bf16 %v401, %v416
    %v418 = vadd.bf16 %v402, %v416
    %v419 = vadd.bf16 %v403, %v416
    %v420 = vadd.bf16 %v404, %v416
    %v421 = vadd.bf16 %v405, %v416
    %v422 = vadd.bf16 %v406, %v416
    %v423 = vadd.bf16 %v407, %v416
    %v424 = vadd.bf16 %v408, %v416
    %v425 = vmax.bf16 %v417, 0
    %v426 = vmax.bf16 %v418, 0
    %v427 = vmax.bf16 %v419, 0
    %v428 = vmax.bf16 %v420, 0
    %v429 = vmax.bf16 %v421, 0
    %v430 = vmax.bf16 %v422, 0
    %v431 = vmax.bf16 %v423, 0
    %v432 = vmax.bf16 %v424, 0
    %v433 = vld [vmem:[%s5] sm:$0x1]
    %v434 = vld [vmem:[#allocation2] sm:$0x1]
    %436 = vset.pattern.permute.xlu0 0
    %437 = vperm.xlu0 %436, %v434
    %v438 = vpop.permute.xlu0 %437
    %v440 = vlaneseq
    %v441 = vshrl.u32 %v440, 7
    %v442 = vsub.s32 0, %v441
    %v443 = vrot.slane %v438, %v442
    %v445 = vsel %vm110, %v433, 0
    %v448 = vsel %vm110, %v425, 0
    %v451 = vsel %vm110, %v426, 0
    %v454 = vsel %vm110, %v427, 0
    %v457 = vsel %vm110, %v428, 0
    %v460 = vsel %vm110, %v429, 0
    %v463 = vsel %vm110, %v430, 0
    %v466 = vsel %vm110, %v431, 0
    %v469 = vsel %vm110, %v432, 0
    %471 = vmatprep.subr.bf16.mxu0 0
    %472 = vmatpush1.bf16.xpose.msra.mxu0 %v448
    %473 = vmatprep.subr.bf16.mxu0 0
    %474 = vmatpush1.bf16.xpose.msra.mxu0 %v451
    %475 = vmatprep.subr.bf16.mxu0 0
    %476 = vmatpush1.bf16.xpose.msra.mxu0 %v454
    %477 = vmatprep.subr.bf16.mxu0 0
    %478 = vmatpush1.bf16.xpose.msra.mxu0 %v457
    %479 = vmatprep.subr.bf16.mxu0 0
    %480 = vmatpush1.bf16.xpose.msra.mxu0 %v460
    %481 = vmatprep.subr.bf16.mxu0 0
    %482 = vmatpush1.bf16.xpose.msra.mxu0 %v463
    %483 = vmatprep.subr.bf16.mxu0 0
    %484 = vmatpush1.bf16.xpose.msra.mxu0 %v466
    %485 = vmatprep.subr.bf16.mxu0 0
    %486 = vmatpush1.bf16.xpose.msra.mxu0 %v469
    %487 = vmatprep.subr.bf16.mxu0 0
    %488 = vmatpush1.bf16.xpose.msra.mxu0 0
    %489 = vmatprep.subr.bf16.mxu0 0
    %490 = vmatpush1.bf16.xpose.msra.mxu0 0
    %491 = vmatprep.subr.bf16.mxu0 0
    %492 = vmatpush1.bf16.xpose.msra.mxu0 0
    %493 = vmatprep.subr.bf16.mxu0 0
    %494 = vmatpush1.bf16.xpose.msra.mxu0 0
    %495 = vmatprep.subr.bf16.mxu0 0
    %496 = vmatpush1.bf16.xpose.msra.mxu0 0
    %497 = vmatprep.subr.bf16.mxu0 0
    %498 = vmatpush1.bf16.xpose.msra.mxu0 0
    %499 = vmatprep.subr.bf16.mxu0 0
    %500 = vmatpush1.bf16.xpose.msra.mxu0 0
    %501 = vmatprep.subr.bf16.mxu0 0
    %502 = vmatpush1.bf16.xpose.msra.mxu0 0
    %503 = vmatprep.mubr.bf16.mxu0 0
    %504 = vmatmul.mubr.bf16.gmra.mrb[0].mxu0 %v445
    %v505 = vpop.f32.mrb[0].mxu0
    %v506 = vadd.f32 %v443, %v505
    %v507 = vpop.f32.mrb[0].mxu0
    %v508 = vpop.f32.mrb[0].mxu0
    %v509 = vpop.f32.mrb[0].mxu0
    %510 = vdwg.mxu0
    %v511 = vsub.f32 0.0, %v506
    %v512 = vmul.f32 %v511, 1.442695
    %v513 = vpow.pop %v512
    %v514 = vadd.f32 %v513, 1.0
    %v515 = vrcp.pop %v514
    %516 = vst [vmem:[%s7] sm:$0x1] %v515
    // Predicated region
    $region42: #{_forward_impl.1} parent=1 // pred_check
      _
    $region43: #{_forward_impl.1} parent=1 // pred_check_branch
      %518 = sbr.rel (0) target = $region45
    $region44: #{_forward_impl.1} parent=1 // pred_region
      _
    $region45: #{_forward_impl.1} parent=1 // pred_fallthru
      _
    // Predicated region
    $region46: #{_forward_impl.1} parent=1 // pred_check
      _
    $region47: #{_forward_impl.1} parent=1 // pred_check_branch
      %520 = sbr.rel (0) target = $region49
    $region48: #{_forward_impl.1} parent=1 // pred_region
      _
    $region49: #{_forward_impl.1} parent=1 // pred_fallthru
      _
    %521 = vsyncpa [#allocation4], 1
    %522 = vsyncpa [#allocation6], 1

</llo_original>
